<compile_context>
chip_gen: v6e
topology: v6e:2x2x1
jax: 0.10.0
libtpu: 0.0.40
codegen_flags: <defaults>
</compile_context>

<pallas_src>
import functools

import jax
import jax.numpy as jnp
from jax.experimental import pallas as pl
from jax.experimental.pallas import tpu as pltpu


_MAX_TF = 2048                 # feature-tile cap (multiple of 128); bounds VMEM for wide F
_TILE_TARGET_BYTES = 8 << 20   # padded VMEM bytes per streamed x tile (x2 when double-buffered)


def _round_up(x, m):
    return (x + m - 1) // m * m


def _choose_tiles(batch, n_features):
    """Pick (tb, tf) from the *padded* VMEM footprint, keeping the batch grid even."""
    tf = n_features if n_features <= _MAX_TF else _MAX_TF
    tf_pad = _round_up(tf, 128)          # lane padding of the x tile in VMEM
    row_bytes = tf_pad * 4               # f32
    tb = max((_TILE_TARGET_BYTES // row_bytes) // 128 * 128, 128)
    if batch <= tb:
        if batch >= 256:
            # v7x has 2 TensorCores: give the "parallel" batch axis >= 2 tiles.
            tb = _round_up(pl.cdiv(batch, 2), 128)
        else:
            tb = batch                   # single small tile; block == full dims is legal
    else:
        nb = pl.cdiv(batch, tb)
        if nb % 2 == 1:                  # keep the batch-grid length even for v7x
            tb = max(_round_up(pl.cdiv(batch, nb + 1), 128), 128)
    return tb, tf


def logreg_kernel(x_ref, w_ref, b_ref, o_ref, acc_ref, *, n_features, tf):
    # x_ref:   (tb, tf) VMEM tile of the input (streamed, double-buffered)
    # w_ref:   (1, tf)  VMEM weight-row tile (resident when F fits one tile)
    # b_ref:   (1, 1)   SMEM scalar bias
    # o_ref:   (1, tb)  VMEM lane-dense output slab
    # acc_ref: (1, tb)  f32 accumulator scratch (lane-dense)
    k = pl.program_id(1)

    @pl.when(k == 0)
    def _():
        acc_ref[...] = jnp.zeros_like(acc_ref)

    x_blk = x_ref[...]
    if (n_features % tf) != 0:
        # Ragged last F tile: zero the padded feature columns so Pallas block
        # padding cannot leak garbage into the contraction (weight is already
        # zero-padded in the wrapper).
        fcol = jax.lax.broadcasted_iota(jnp.int32, x_blk.shape, 1) + k * tf
        x_blk = jnp.where(fcol < n_features, x_blk, 0.0)

    # Natural MXU layout: the streamed x tile is the LHS contracted over its
    # lane dim; only the tiny (1, tf) weight operand needs any relayout.
    col_out = jax.lax.dot_general(
        x_blk, w_ref[...],
        dimension_numbers=(((1,), (1,)), ((), ())),
        preferred_element_type=jnp.float32,
        precision=jax.lax.Precision.HIGHEST,
    )                                           # (tb, 1)
    # Relayout only the small per-tile result to the lane-dense accumulator.
    acc_ref[...] += jnp.transpose(col_out)      # (1, tb)

    @pl.when(k == pl.num_programs(1) - 1)
    def _():
        z = acc_ref[...] + b_ref[0, 0]
        # exp/logistic run on the EUP slot -> effectively free in this HBM-bound kernel.
        o_ref[...] = jax.nn.sigmoid(z).astype(o_ref.dtype)


@functools.partial(jax.jit, static_argnames=("block_rows", "block_feats"))
def logistic_regression(x, weight, bias, *, block_rows=None, block_feats=None):
    """x: (B, F) f32, weight: (1, F) f32 (PyTorch nn.Linear layout), bias: (1,) f32
    -> (B, 1) f32 = sigmoid(x @ weight.T + bias)."""
    B, F = x.shape
    tb, tf = _choose_tiles(B, F)
    if block_rows is not None:
        tb = block_rows
    if block_feats is not None:
        tf = block_feats

    nb = pl.cdiv(B, tb)
    nf = pl.cdiv(F, tf)

    # Zero-pad the (tiny) weight row so every F tile of it is backed by real zeros.
    w = weight.astype(jnp.float32)
    f_ceil = nf * tf
    if f_ceil != F:
        w = jnp.pad(w, ((0, 0), (0, f_ceil - F)))
    b2 = bias.reshape(1, 1).astype(jnp.float32)

    kernel = functools.partial(logreg_kernel, n_features=F, tf=tf)

    out = pl.pallas_call(
        kernel,
        out_shape=jax.ShapeDtypeStruct((1, B), jnp.float32),
        grid_spec=pltpu.PrefetchScalarGridSpec(
            num_scalar_prefetch=0,
            grid=(nb, nf),                       # batch tiles (parallel), F tiles (reduction, last)
            in_specs=[
                # streamed batch x F tiles of x (prefetch next while computing current)
                pl.BlockSpec((tb, tf), lambda i, k: (i, k)),
                # weight row tile; resident in VMEM when F fits a single tile
                pl.BlockSpec((1, tf), lambda i, k: (0, k)),
                # scalar bias lives in SMEM -- no per-tile VMEM DMA
                pl.BlockSpec(memory_space=pltpu.MemorySpace.SMEM),
            ],
            # lane-dense output slab: same block across the F axis (accumulator pattern)
            out_specs=pl.BlockSpec((1, tb), lambda i, k: (0, i)),
            scratch_shapes=[pltpu.VMEM((1, tb), jnp.float32)],
        ),
        compiler_params=pltpu.CompilerParams(
            dimension_semantics=("parallel", "arbitrary"),
            vmem_limit_bytes=48 * 1024 * 1024,
        ),
    )(x, w, b2)
    return out.reshape(B, 1)


if __name__ == "__main__":
    key = jax.random.PRNGKey(0)
    kx, kw, kb = jax.random.split(key, 3)

    batch, n_features = 8, 32

    x = jax.random.normal(kx, (batch, n_features), dtype=jnp.float32)

    # Deterministic init matching nn.Linear(n_features, 1): U(-1/sqrt(F), 1/sqrt(F));
    # weight keeps PyTorch's (out_features, in_features) = (1, F) layout.
    bound = 1.0 / (n_features ** 0.5)
    weight = jax.random.uniform(kw, (1, n_features), minval=-bound, maxval=bound,
                                dtype=jnp.float32)
    bias = jax.random.uniform(kb, (1,), minval=-bound, maxval=bound,
                              dtype=jnp.float32)

    y = logistic_regression(x, weight, bias)
    jax.block_until_ready(y)

    # sanity check vs. pure-JAX reference
    y_ref = jax.nn.sigmoid(x @ weight.T + bias)
    assert y.shape == (batch, 1)
    assert jnp.allclose(y, y_ref, atol=1e-5, rtol=1e-5)

    print("KERNEL_OK")
</pallas_src>

<mosaic_0001>
module attributes {stable_mosaic.version = 11 : i64} {
  func.func @logreg_kernel(%arg0: i32, %arg1: i32, %arg2: memref<8x32xf32, #tpu.memory_space<vmem>>, %arg3: memref<1x32xf32, #tpu.memory_space<vmem>>, %arg4: memref<1x1xf32, #tpu.memory_space<smem>>, %arg5: memref<1x8xf32, #tpu.memory_space<vmem>>, %arg6: memref<1x8xf32, #tpu.memory_space<vmem>>) attributes {dimension_semantics = [#tpu.dimension_semantics<parallel>, #tpu.dimension_semantics<arbitrary>], iteration_bounds = array<i64: 1, 1>, scalar_prefetch = 0 : i64, scratch_operands = 1 : i64, tpu.core_type = #tpu.core_type<tc>, window_params = [{transform_indices = @transform_0, window_bounds = array<i64: 8, 32>}, {transform_indices = @transform_1, window_bounds = array<i64: 1, 32>}, {transform_indices = @transform_2, window_bounds = array<i64: 1, 1>}, {transform_indices = @transform_3, window_bounds = array<i64: 1, 8>}]} {
    %c0_i32 = arith.constant 0 : i32
    %0 = arith.cmpi eq, %arg1, %c0_i32 : i32
    %1 = arith.extui %0 : i1 to i32
    %c0_i32_0 = arith.constant 0 : i32
    %2 = arith.cmpi ne, %1, %c0_i32_0 : i32
    scf.if %2 {
      %cst_10 = arith.constant 0.000000e+00 : f32
      %13 = vector.broadcast %cst_10 : f32 to vector<1x8xf32>
      %c0_11 = arith.constant 0 : index
      %c0_12 = arith.constant 0 : index
      %14 = vector.load %arg6[%c0_11, %c0_12] : memref<1x8xf32, #tpu.memory_space<vmem>>, vector<1x8xf32>
      tpu.vector_store %arg6[%c0_11, %c0_12], %13 {strides = array<i32>} : memref<1x8xf32, #tpu.memory_space<vmem>>, vector<1x8xf32>,
    } else {
    }
    %c0 = arith.constant 0 : index
    %c0_1 = arith.constant 0 : index
    %3 = vector.load %arg2[%c0, %c0_1] : memref<8x32xf32, #tpu.memory_space<vmem>>, vector<8x32xf32>
    %c0_2 = arith.constant 0 : index
    %c0_3 = arith.constant 0 : index
    %4 = vector.load %arg3[%c0_2, %c0_3] : memref<1x32xf32, #tpu.memory_space<vmem>>, vector<1x32xf32>
    %cst = arith.constant dense<0.000000e+00> : vector<8x1xf32>
    %5 = tpu.matmul %3, %4, %cst {dimension_numbers = #tpu.dot_dimension_numbers<[1], [1], [0], [0], [0, 0, 1, 0], [], []>, precision = #tpu.contract_precision<fp32>} : vector<8x32xf32>, vector<1x32xf32>, vector<8x1xf32> -> vector<8x1xf32>
    %c0_4 = arith.constant 0 : index
    %c0_5 = arith.constant 0 : index
    %6 = vector.load %arg6[%c0_4, %c0_5] : memref<1x8xf32, #tpu.memory_space<vmem>>, vector<1x8xf32>
    %7 = tpu.transpose %5, [1, 0] : vector<8x1xf32> -> vector<1x8xf32>
    %8 = arith.addf %6, %7 : vector<1x8xf32>
    %c0_6 = arith.constant 0 : index
    %c0_7 = arith.constant 0 : index
    %9 = vector.load %arg6[%c0_6, %c0_7] : memref<1x8xf32, #tpu.memory_space<vmem>>, vector<1x8xf32>
    tpu.vector_store %arg6[%c0_6, %c0_7], %8 {strides = array<i32>} : memref<1x8xf32, #tpu.memory_space<vmem>>, vector<1x8xf32>,
    %c0_i32_8 = arith.constant 0 : i32
    %10 = arith.cmpi eq, %arg1, %c0_i32_8 : i32
    %11 = arith.extui %10 : i1 to i32
    %c0_i32_9 = arith.constant 0 : i32
    %12 = arith.cmpi ne, %11, %c0_i32_9 : i32
    scf.if %12 {
      %c0_10 = arith.constant 0 : index
      %c0_11 = arith.constant 0 : index
      %13 = vector.load %arg6[%c0_10, %c0_11] : memref<1x8xf32, #tpu.memory_space<vmem>>, vector<1x8xf32>
      %c0_12 = arith.constant 0 : index
      %c0_13 = arith.constant 0 : index
      %14 = memref.load %arg4[%c0_12, %c0_13] : memref<1x1xf32, #tpu.memory_space<smem>>
      %15 = vector.broadcast %14 : f32 to vector<1x8xf32>
      %16 = arith.addf %13, %15 : vector<1x8xf32>
      %17 = arith.negf %16 : vector<1x8xf32>
      %18 = math.exp %17 : vector<1x8xf32>
      %cst_14 = arith.constant 1.000000e+00 : f32
      %19 = vector.broadcast %cst_14 : f32 to vector<1x8xf32>
      %20 = arith.addf %19, %18 : vector<1x8xf32>
      %21 = arith.divf %19, %20 : vector<1x8xf32>
      %c0_15 = arith.constant 0 : index
      %c0_16 = arith.constant 0 : index
      %22 = vector.load %arg5[%c0_15, %c0_16] : memref<1x8xf32, #tpu.memory_space<vmem>>, vector<1x8xf32>
      tpu.vector_store %arg5[%c0_15, %c0_16], %21 {strides = array<i32>} : memref<1x8xf32, #tpu.memory_space<vmem>>, vector<1x8xf32>,
    } else {
    }
    return
  }
  func.func @transform_0(%arg0: i32, %arg1: i32) -> (i32, i32) {
    %c0_i32 = arith.constant 0 : i32
    return %arg0, %arg1 : i32, i32
  }
  func.func @transform_1(%arg0: i32, %arg1: i32) -> (i32, i32) {
    %c0_i32 = arith.constant 0 : i32
    %c0_i32_0 = arith.constant 0 : i32
    return %c0_i32, %arg1 : i32, i32
  }
  func.func @transform_2(%arg0: i32, %arg1: i32) -> (i32, i32) {
    %c0_i32 = arith.constant 0 : i32
    %c0_i32_0 = arith.constant 0 : i32
    %c0_i32_1 = arith.constant 0 : i32
    return %c0_i32, %c0_i32_0 : i32, i32
  }
  func.func @transform_3(%arg0: i32, %arg1: i32) -> (i32, i32) {
    %c0_i32 = arith.constant 0 : i32
    %c0_i32_0 = arith.constant 0 : i32
    return %c0_i32, %arg0 : i32, i32
  }
}

</mosaic_0001>

<llo_original>
// kernel: logistic_regression.1
$region0: #{logistic_regression.1}
  #allocation0 [shape = 'u32[]', space=smem, size = 0x4, offset = 0x4, fixed_abs, tag = 'smem constant byte address 0x4 - core index']
  #allocation1 [shape = 'u32[144,128]{1,0:T(1,128)}', space=vmem, size = 0x12000, scoped, tag = 'internal scratch']
  #allocation2 [shape = 'f32[1,8]{1,0:T(1,128)}', space=vmem, size = 0x200, scoped, tag = 'scratch operand']
  #allocation3 [shape = 'f32[1,1]{1,0:T(1,128)S(6)}', space=smem, size = 0x200, scoped, tag = 'scoped memory for logistic_regression.1']
  %s0 = inlined_call_operand.hbm [shape: f32[8,32], index: 0, kind: input, shape index: {}]
  %s1 = inlined_call_operand.vmem [shape: f32[1,32], index: 1, kind: input, shape index: {}]
  %s2 = inlined_call_operand.<no memory space> [shape: f32[1,1], index: 2, kind: input, shape index: {}]
  %s3 = inlined_call_operand.hbm [shape: f32[1,8], index: 3, kind: output, shape index: {}]
  %s4 = sld [smem:[#allocation0]]
  $region34: #{logistic_regression.1} parent=0
    _
  %s6 = ssub.s32 1, %s4
  %s7 = scalar_select 0, %s6, %s4
  %8 = sst [smem:[#allocation3]] %s2
  $region1: #{logistic_regression.1} parent=0
    #allocation4 [shape = 'u8[4096]{0}', space=vmem, size = 0x1000, scoped, tag = 'input window, operand 0, single buffered']
    #allocation5 [shape = 's32[1]{0}', space=sflag, size = 0x4, scoped, tag = 'scoped memory for logistic_regression.1']
    #allocation6 [shape = 's32[1]{0}', space=sflag, size = 0x4, scoped, tag = 'scoped memory for logistic_regression.1']
    #allocation7 [shape = 'u8[512]{0}', space=vmem, size = 0x400, scoped, tag = 'output window, operand 0, single buffered']
    %9 = vsyncpa [#allocation5], 0
    %10 = vsyncpa [#allocation6], 0
    // Predicated region
    $region2: #{logistic_regression.1} parent=1 // pred_check
      _
    $region3: #{logistic_regression.1} parent=1 // pred_check_branch
      %12 = sbr.rel (0) target = $region5
    $region4: #{logistic_regression.1} parent=1 // pred_region
      %s14 = ssub.s32 128, 128
      %15 = vsyncadd [#allocation5], %s14
      %s17 = sshll.u32 [#allocation4], 4
      %s18 = int_to_ptr.vmem [resolvable:$true] %s17
      %20 = dma.hbm_to_vmem [thread:$0]  %s0, 128, %s18, [#allocation5]
    $region5: #{logistic_regression.1} parent=1 // pred_fallthru
      _
    // Predicated region
    $region6: #{logistic_regression.1} parent=1 // pred_check
      _
    $region7: #{logistic_regression.1} parent=1 // pred_check_branch
      %22 = sbr.rel (0) target = $region9
    $region8: #{logistic_regression.1} parent=1 // pred_region
      _
    $region9: #{logistic_regression.1} parent=1 // pred_fallthru
      _
    // Predicated region
    $region10: #{logistic_regression.1} parent=1 // pred_check
      _
    $region11: #{logistic_regression.1} parent=1 // pred_check_branch
      %24 = sbr.rel (0) target = $region13
    $region12: #{logistic_regression.1} parent=1 // pred_region
      _
    $region13: #{logistic_regression.1} parent=1 // pred_fallthru
      _
    // Predicated region
    $region14: #{logistic_regression.1} parent=1 // pred_check
      _
    $region15: #{logistic_regression.1} parent=1 // pred_check_branch
      %26 = sbr.rel (0) target = $region17
    $region16: #{logistic_regression.1} parent=1 // pred_region
      %27 = dma.done [#allocation5], 128
    $region17: #{logistic_regression.1} parent=1 // pred_fallthru
      _
    %p28 = scmp.eq.s32.totalorder 0, 0
    // Predicated region
    $region18: #{logistic_regression.1} parent=1 // pred_check
      %p29 = pneg %p28
    $region19: #{logistic_regression.1} parent=1 // pred_check_branch
      %31 = sbr.rel (%p29) target = $region21
    $region20: #{logistic_regression.1} parent=1 // pred_region
      %vm32 = vcmask 57344
      %33 = vst.msk [vmem:[#allocation2] sm:$0x1] %vm32, 0.0
    $region21: #{logistic_regression.1} parent=1 // pred_fallthru
      _
    %v34 = vld [vmem:[#allocation4] sm:$0xff]
    %v35 = vld [vmem:[%s1] sm:$0x1]
    %v37 = vlaneseq
    %v38 = vshrl.u32 %v37, 7
    %v39 = vsub.s32 0, %v38
    %v40 = vrot.slane %v35, %v39
    %v42 = vmul.f32 %v34, %v40
    %vm43 = vcmask 261120
    %v44 = vsel %vm43, %v42, 0.0
    %45 = vadd.xlane.f32.xlu0 %v44
    %v46 = vpop.xlane.xlu0 %45
    %v47 = vld [vmem:[#allocation2] sm:$0x1]
    %48 = vxpose.xlu0.b32.start [1/16] %v46, 128
    %49 = vxpose.xlu0.b32.cont [2/16] 0.0, 128
    %50 = vxpose.xlu0.b32.cont [3/16] 0.0, 128
    %51 = vxpose.xlu0.b32.cont [4/16] 0.0, 128
    %52 = vxpose.xlu0.b32.cont [5/16] 0.0, 128
    %53 = vxpose.xlu0.b32.cont [6/16] 0.0, 128
    %54 = vxpose.xlu0.b32.cont [7/16] 0.0, 128
    %55 = vxpose.xlu0.b32.cont [8/16] 0.0, 128
    %56 = vxpose.xlu0.b32.cont [9/16] 0.0, 128
    %57 = vxpose.xlu0.b32.cont [10/16] 0.0, 128
    %58 = vxpose.xlu0.b32.cont [11/16] 0.0, 128
    %59 = vxpose.xlu0.b32.cont [12/16] 0.0, 128
    %60 = vxpose.xlu0.b32.cont [13/16] 0.0, 128
    %61 = vxpose.xlu0.b32.cont [14/16] 0.0, 128
    %62 = vxpose.xlu0.b32.cont [15/16] 0.0, 128
    %63 = vxpose.xlu0.b32.end [16/16] 0.0, 128
    %v64 = vpop.trf.xlu0
    %v65 = vpop.trf.xlu0
    %v66 = vpop.trf.xlu0
    %v67 = vpop.trf.xlu0
    %v68 = vpop.trf.xlu0
    %v69 = vpop.trf.xlu0
    %v70 = vpop.trf.xlu0
    %v71 = vpop.trf.xlu0
    %v72 = vpop.trf.xlu0
    %v73 = vpop.trf.xlu0
    %v74 = vpop.trf.xlu0
    %v75 = vpop.trf.xlu0
    %v76 = vpop.trf.xlu0
    %v77 = vpop.trf.xlu0
    %v78 = vpop.trf.xlu0
    %v79 = vpop.trf.xlu0
    %v80 = vadd.f32 %v47, %v64
    %vm81 = vcmask 57344
    %82 = vst.msk [vmem:[#allocation2] sm:$0x1] %vm81, %v80
    // Predicated region
    $region22: #{logistic_regression.1} parent=1 // pred_check
      %p83 = pneg %p28
    $region23: #{logistic_regression.1} parent=1 // pred_check_branch
      %85 = sbr.rel (%p83) target = $region25
    $region24: #{logistic_regression.1} parent=1 // pred_region
      %v86 = vld [vmem:[#allocation2] sm:$0x1]
      %s87 = sld [smem:[#allocation3]]
      %v88 = vstv %s87
      %v89 = vadd.f32 %v86, %v88
      %v90 = vxor.u32 %v89, 2147483648
      %v91 = vmul.f32 %v90, 1.442695
      %v92 = vpow.pop %v91
      %v93 = vadd.f32 %v92, 1.0
      %v94 = vrcp.pop %v93
      %v95 = vmul.f32 1.0, %v94
      %96 = vst.msk [vmem:[#allocation7] sm:$0x1] %vm81, %v95
    $region25: #{logistic_regression.1} parent=1 // pred_fallthru
      _
    // Predicated region
    $region26: #{logistic_regression.1} parent=1 // pred_check
      _
    $region27: #{logistic_regression.1} parent=1 // pred_check_branch
      %98 = sbr.rel (0) target = $region29
    $region28: #{logistic_regression.1} parent=1 // pred_region
      %s100 = ssub.s32 16, 16
      %101 = vsyncadd [#allocation6], %s100
      %s103 = sshll.u32 [#allocation7], 4
      %s104 = int_to_ptr.vmem [resolvable:$true] %s103
      %106 = dma.vmem_to_hbm [thread:$0]  %s104, 16, %s3, [#allocation6]
    $region29: #{logistic_regression.1} parent=1 // pred_fallthru
      _
    // Predicated region
    $region30: #{logistic_regression.1} parent=1 // pred_check
      _
    $region31: #{logistic_regression.1} parent=1 // pred_check_branch
      %108 = sbr.rel (0) target = $region33
    $region32: #{logistic_regression.1} parent=1 // pred_region
      %109 = dma.done [#allocation6], 16
    $region33: #{logistic_regression.1} parent=1 // pred_fallthru
      _
    %110 = vsyncpa [#allocation5], 1
    %111 = vsyncpa [#allocation6], 1

</llo_original>
